<compile_context>
chip_gen: v7x
topology: tpu7x:2x2x1
jax: 0.10.0
libtpu: 0.0.40
codegen_flags: <defaults>
</compile_context>

<pallas_src>
import functools
import math

import jax
import jax.numpy as jnp
from jax import lax
from jax.experimental import pallas as pl
from jax.experimental.pallas import tpu as pltpu


def _rtn_kernel(w1t_ref, b1_ref, w2t_ref, b2_ref, w3t_ref, b3_ref,
                w4t_ref, b4_ref, x_ref, noise_ref, o_ref, *, scale):
    # x tile arrives in natural (tb, C) layout; the first matmul contracts the
    # minor dims of both operands, producing the lane-major (C, tb) activation
    # without any wrapper-side transpose.
    x = x_ref[...]                                                      # (tb, C)

    # ---- encoder: Linear(C,C) -> ReLU -> Linear(C,K), weights-stationary ----
    h = lax.dot_general(w1t_ref[...], x,
                        dimension_numbers=(((1,), (1,)), ((), ())),
                        preferred_element_type=jnp.float32)             # (C, tb)
    h = jnp.maximum(h + b1_ref[...], 0.0)
    z = jnp.dot(w2t_ref[...], h,
                preferred_element_type=jnp.float32) + b2_ref[...]       # (K, tb)

    # ---- power normalization: C**2 * (z / ||z||_2); per-sample == per-lane ----
    inv_norm = lax.rsqrt(jnp.sum(z * z, axis=0, keepdims=True))         # (1, tb) EUP
    z = z * (scale * inv_norm)

    # ---- AWGN channel noise (already lane-major (K, tb)) ----
    z = z + noise_ref[...]

    # ---- decoder: Linear(K,K) -> ReLU -> Linear(K,C) ----
    h2 = jnp.dot(w3t_ref[...], z, preferred_element_type=jnp.float32)
    h2 = jnp.maximum(h2 + b3_ref[...], 0.0)
    o_ref[...] = (jnp.dot(w4t_ref[...], h2, preferred_element_type=jnp.float32)
                  + b4_ref[...])                                         # (C, tb)


def _round_up(v, m):
    return (v + m - 1) // m * m


def radio_transformer_forward(x, params, noise_t, in_channels, *,
                              tb=8192, transpose_output=False):
    """Fused RadioTransformerNetwork forward.

    x        : (B, C) float32 — natural module layout, streamed as-is.
    noise_t  : (K, B) float32 — AWGN already in the kernel's lane-major layout.
    returns  : (C, B) float32 lane-major result (recommended: no extra HBM pass),
               or (B, C) if transpose_output=True (module-identical layout).
    """
    B, C = x.shape
    K = noise_t.shape[0]

    # Batch tile: lane width of every block, multiple of 128, capped at the
    # (rounded-up) batch.  Sweep 4096-16384 for large B.
    tb_eff = min(_round_up(max(int(tb), 1), 128), _round_up(B, 128))
    grid = (pl.cdiv(B, tb_eff),)

    # Weights-stationary operands: W^T is (out, in); bias (out, 1) broadcasts
    # along lanes (batch).  All eight are VMEM-resident via constant index maps.
    w1t = params["w1"].T; b1 = params["b1"][:, None]
    w2t = params["w2"].T; b2 = params["b2"][:, None]
    w3t = params["w3"].T; b3 = params["b3"][:, None]
    w4t = params["w4"].T; b4 = params["b4"][:, None]

    resident = lambda a: pl.BlockSpec(a.shape, lambda i: (0, 0))
    x_spec = pl.BlockSpec((tb_eff, C), lambda i: (i, 0))       # natural-layout input
    lane_major = lambda rows: pl.BlockSpec((rows, tb_eff), lambda i: (0, i))

    kernel = functools.partial(_rtn_kernel, scale=float(in_channels) ** 2)

    out_t = pl.pallas_call(
        kernel,
        out_shape=jax.ShapeDtypeStruct((C, B), jnp.float32),
        grid=grid,
        in_specs=[resident(w1t), resident(b1), resident(w2t), resident(b2),
                  resident(w3t), resident(b3), resident(w4t), resident(b4),
                  x_spec, lane_major(K)],
        out_specs=lane_major(C),
        compiler_params=pltpu.CompilerParams(
            dimension_semantics=("parallel",),        # megacore / v7x dual-TC split
            vmem_limit_bytes=32 * 1024 * 1024),
    )(w1t, b1, w2t, b2, w3t, b3, w4t, b4, x, noise_t)

    return out_t.T if transpose_output else out_t


def init_params(key, in_channels, compressed_dim):
    """Deterministic synthetic init matching nn.Linear (weights stored as (in, out))."""
    ks = jax.random.split(key, 8)

    def linear(kw, kb, fan_in, fan_out):
        bound = 1.0 / math.sqrt(fan_in)
        w = jax.random.uniform(kw, (fan_in, fan_out), jnp.float32, -bound, bound)
        b = jax.random.uniform(kb, (fan_out,), jnp.float32, -bound, bound)
        return w, b

    w1, b1 = linear(ks[0], ks[1], in_channels, in_channels)
    w2, b2 = linear(ks[2], ks[3], in_channels, compressed_dim)
    w3, b3 = linear(ks[4], ks[5], compressed_dim, compressed_dim)
    w4, b4 = linear(ks[6], ks[7], compressed_dim, in_channels)
    return dict(w1=w1, b1=b1, w2=w2, b2=b2, w3=w3, b3=b3, w4=w4, b4=b4)


def reference_forward(x, params, noise, in_channels):
    """Pure-JAX reference of the PyTorch forward for validation ((B, C) layout)."""
    h = jnp.maximum(x @ params["w1"] + params["b1"], 0.0)
    z = h @ params["w2"] + params["b2"]
    z = (in_channels ** 2) * (z / jnp.linalg.norm(z, axis=-1, keepdims=True))
    z = z + noise
    h2 = jnp.maximum(z @ params["w3"] + params["b3"], 0.0)
    return h2 @ params["w4"] + params["b4"]


if __name__ == "__main__":
    B = 384            # small test batch; 384 = 1.5 * TB exercises the ragged edge tile
    IN_CHANNELS = 16   # in_channels
    COMPRESSED = 4     # compressed_dim
    TB = 256           # small tile for the test; production default is tb=8192

    key = jax.random.PRNGKey(0)
    k_params, k_x, k_noise = jax.random.split(key, 3)

    params = init_params(k_params, IN_CHANNELS, COMPRESSED)
    x = jax.random.normal(k_x, (B, IN_CHANNELS), dtype=jnp.float32)

    training_signal_noise_ratio = 5.01187
    communication_rate = 1
    # TODO(synk): the AWGN could be generated in-kernel (pltpu.prng_random_bits
    # + Box-Muller) to drop this HBM stream entirely; it is kept as an explicit
    # input — generated host-side directly in the kernel's (K, B) layout so no
    # transpose/pad ever touches it — to keep the forward deterministically
    # verifiable against the reference.
    noise_t = jax.random.normal(k_noise, (COMPRESSED, B), dtype=jnp.float32) / (
        (2 * communication_rate * training_signal_noise_ratio) ** 0.5
    )

    out_t = radio_transformer_forward(x, params, noise_t, IN_CHANNELS, tb=TB)
    out_t = jax.block_until_ready(out_t)

    ref = reference_forward(x, params, noise_t.T, IN_CHANNELS)
    assert out_t.shape == (IN_CHANNELS, B)
    assert jnp.allclose(out_t, ref.T, atol=1e-4, rtol=1e-4), "mismatch vs reference"

    # Module-identical (B, C) layout path (extra transpose, off the fast path).
    out = radio_transformer_forward(x, params, noise_t, IN_CHANNELS, tb=TB,
                                    transpose_output=True)
    assert jnp.allclose(out, ref, atol=1e-4, rtol=1e-4), "mismatch vs reference (B,C)"

    print("KERNEL_OK")
</pallas_src>

<mosaic_0001>
module attributes {stable_mosaic.version = 11 : i64} {
  func.func @_rtn_kernel(%arg0: i32, %arg1: memref<16x16xf32, #tpu.memory_space<vmem>>, %arg2: memref<16x1xf32, #tpu.memory_space<vmem>>, %arg3: memref<4x16xf32, #tpu.memory_space<vmem>>, %arg4: memref<4x1xf32, #tpu.memory_space<vmem>>, %arg5: memref<4x4xf32, #tpu.memory_space<vmem>>, %arg6: memref<4x1xf32, #tpu.memory_space<vmem>>, %arg7: memref<16x4xf32, #tpu.memory_space<vmem>>, %arg8: memref<16x1xf32, #tpu.memory_space<vmem>>, %arg9: memref<256x16xf32, #tpu.memory_space<vmem>>, %arg10: memref<4x256xf32, #tpu.memory_space<vmem>>, %arg11: memref<16x256xf32, #tpu.memory_space<vmem>>) attributes {dimension_semantics = [#tpu.dimension_semantics<parallel>], iteration_bounds = array<i64: 2>, scalar_prefetch = 0 : i64, scratch_operands = 0 : i64, tpu.core_type = #tpu.core_type<tc>, window_params = [{pipeline_mode = #tpu.pipeline_mode<synchronous>, transform_indices = @transform_0, window_bounds = array<i64: 16, 16>}, {pipeline_mode = #tpu.pipeline_mode<synchronous>, transform_indices = @transform_1, window_bounds = array<i64: 16, 1>}, {pipeline_mode = #tpu.pipeline_mode<synchronous>, transform_indices = @transform_2, window_bounds = array<i64: 4, 16>}, {pipeline_mode = #tpu.pipeline_mode<synchronous>, transform_indices = @transform_3, window_bounds = array<i64: 4, 1>}, {pipeline_mode = #tpu.pipeline_mode<synchronous>, transform_indices = @transform_4, window_bounds = array<i64: 4, 4>}, {pipeline_mode = #tpu.pipeline_mode<synchronous>, transform_indices = @transform_5, window_bounds = array<i64: 4, 1>}, {pipeline_mode = #tpu.pipeline_mode<synchronous>, transform_indices = @transform_6, window_bounds = array<i64: 16, 4>}, {pipeline_mode = #tpu.pipeline_mode<synchronous>, transform_indices = @transform_7, window_bounds = array<i64: 16, 1>}, {transform_indices = @transform_8, window_bounds = array<i64: 256, 16>}, {transform_indices = @transform_9, window_bounds = array<i64: 4, 256>}, {transform_indices = @transform_10, window_bounds = array<i64: 16, 256>}]} {
    %c0 = arith.constant 0 : index
    %c0_0 = arith.constant 0 : index
    %0 = vector.load %arg9[%c0, %c0_0] : memref<256x16xf32, #tpu.memory_space<vmem>>, vector<256x16xf32>
    %c0_1 = arith.constant 0 : index
    %c0_2 = arith.constant 0 : index
    %1 = vector.load %arg1[%c0_1, %c0_2] : memref<16x16xf32, #tpu.memory_space<vmem>>, vector<16x16xf32>
    %cst = arith.constant dense<0.000000e+00> : vector<16x256xf32>
    %2 = tpu.matmul %1, %0, %cst {dimension_numbers = #tpu.dot_dimension_numbers<[1], [1], [0], [0], [0, 0, 1, 0], [], []>} : vector<16x16xf32>, vector<256x16xf32>, vector<16x256xf32> -> vector<16x256xf32>
    %c0_3 = arith.constant 0 : index
    %c0_4 = arith.constant 0 : index
    %3 = vector.load %arg2[%c0_3, %c0_4] : memref<16x1xf32, #tpu.memory_space<vmem>>, vector<16x1xf32>
    %4 = vector.broadcast %3 : vector<16x1xf32> to vector<16x256xf32>
    %5 = arith.addf %2, %4 : vector<16x256xf32>
    %cst_5 = arith.constant 0.000000e+00 : f32
    %6 = vector.broadcast %cst_5 : f32 to vector<16x256xf32>
    %7 = arith.maximumf %5, %6 : vector<16x256xf32>
    %c0_6 = arith.constant 0 : index
    %c0_7 = arith.constant 0 : index
    %8 = vector.load %arg3[%c0_6, %c0_7] : memref<4x16xf32, #tpu.memory_space<vmem>>, vector<4x16xf32>
    %cst_8 = arith.constant dense<0.000000e+00> : vector<4x256xf32>
    %9 = tpu.matmul %8, %7, %cst_8 {dimension_numbers = #tpu.dot_dimension_numbers<[1], [0], [0], [1], [0, 0, 1, 1], [], []>} : vector<4x16xf32>, vector<16x256xf32>, vector<4x256xf32> -> vector<4x256xf32>
    %c0_9 = arith.constant 0 : index
    %c0_10 = arith.constant 0 : index
    %10 = vector.load %arg4[%c0_9, %c0_10] : memref<4x1xf32, #tpu.memory_space<vmem>>, vector<4x1xf32>
    %11 = vector.broadcast %10 : vector<4x1xf32> to vector<4x256xf32>
    %12 = arith.addf %9, %11 : vector<4x256xf32>
    %13 = arith.mulf %12, %12 : vector<4x256xf32>
    %cst_11 = arith.constant dense<0.000000e+00> : vector<256xf32>
    %14 = vector.multi_reduction <add>, %13, %cst_11 [0] : vector<4x256xf32> to vector<256xf32>
    %15 = vector.shape_cast %14 : vector<256xf32> to vector<1x256xf32>
    %16 = math.rsqrt %15 : vector<1x256xf32>
    %cst_12 = arith.constant 2.560000e+02 : f32
    %17 = vector.broadcast %cst_12 : f32 to vector<1x256xf32>
    %18 = arith.mulf %17, %16 : vector<1x256xf32>
    %19 = vector.broadcast %18 : vector<1x256xf32> to vector<4x256xf32>
    %20 = arith.mulf %12, %19 : vector<4x256xf32>
    %c0_13 = arith.constant 0 : index
    %c0_14 = arith.constant 0 : index
    %21 = vector.load %arg10[%c0_13, %c0_14] : memref<4x256xf32, #tpu.memory_space<vmem>>, vector<4x256xf32>
    %22 = arith.addf %20, %21 : vector<4x256xf32>
    %c0_15 = arith.constant 0 : index
    %c0_16 = arith.constant 0 : index
    %23 = vector.load %arg5[%c0_15, %c0_16] : memref<4x4xf32, #tpu.memory_space<vmem>>, vector<4x4xf32>
    %cst_17 = arith.constant dense<0.000000e+00> : vector<4x256xf32>
    %24 = tpu.matmul %23, %22, %cst_17 {dimension_numbers = #tpu.dot_dimension_numbers<[1], [0], [0], [1], [0, 0, 1, 1], [], []>} : vector<4x4xf32>, vector<4x256xf32>, vector<4x256xf32> -> vector<4x256xf32>
    %c0_18 = arith.constant 0 : index
    %c0_19 = arith.constant 0 : index
    %25 = vector.load %arg6[%c0_18, %c0_19] : memref<4x1xf32, #tpu.memory_space<vmem>>, vector<4x1xf32>
    %26 = vector.broadcast %25 : vector<4x1xf32> to vector<4x256xf32>
    %27 = arith.addf %24, %26 : vector<4x256xf32>
    %cst_20 = arith.constant 0.000000e+00 : f32
    %28 = vector.broadcast %cst_20 : f32 to vector<4x256xf32>
    %29 = arith.maximumf %27, %28 : vector<4x256xf32>
    %c0_21 = arith.constant 0 : index
    %c0_22 = arith.constant 0 : index
    %30 = vector.load %arg7[%c0_21, %c0_22] : memref<16x4xf32, #tpu.memory_space<vmem>>, vector<16x4xf32>
    %cst_23 = arith.constant dense<0.000000e+00> : vector<16x256xf32>
    %31 = tpu.matmul %30, %29, %cst_23 {dimension_numbers = #tpu.dot_dimension_numbers<[1], [0], [0], [1], [0, 0, 1, 1], [], []>} : vector<16x4xf32>, vector<4x256xf32>, vector<16x256xf32> -> vector<16x256xf32>
    %c0_24 = arith.constant 0 : index
    %c0_25 = arith.constant 0 : index
    %32 = vector.load %arg8[%c0_24, %c0_25] : memref<16x1xf32, #tpu.memory_space<vmem>>, vector<16x1xf32>
    %33 = vector.broadcast %32 : vector<16x1xf32> to vector<16x256xf32>
    %34 = arith.addf %31, %33 : vector<16x256xf32>
    %c0_26 = arith.constant 0 : index
    %c0_27 = arith.constant 0 : index
    %35 = vector.load %arg11[%c0_26, %c0_27] : memref<16x256xf32, #tpu.memory_space<vmem>>, vector<16x256xf32>
    tpu.vector_store %arg11[%c0_26, %c0_27], %34 {strides = array<i32>} : memref<16x256xf32, #tpu.memory_space<vmem>>, vector<16x256xf32>,
    return
  }
  func.func @transform_0(%arg0: i32) -> (i32, i32) {
    %c0_i32 = arith.constant 0 : i32
    %c0_i32_0 = arith.constant 0 : i32
    %c0_i32_1 = arith.constant 0 : i32
    return %c0_i32, %c0_i32_0 : i32, i32
  }
  func.func @transform_1(%arg0: i32) -> (i32, i32) {
    %c0_i32 = arith.constant 0 : i32
    %c0_i32_0 = arith.constant 0 : i32
    %c0_i32_1 = arith.constant 0 : i32
    return %c0_i32, %c0_i32_0 : i32, i32
  }
  func.func @transform_2(%arg0: i32) -> (i32, i32) {
    %c0_i32 = arith.constant 0 : i32
    %c0_i32_0 = arith.constant 0 : i32
    %c0_i32_1 = arith.constant 0 : i32
    return %c0_i32, %c0_i32_0 : i32, i32
  }
  func.func @transform_3(%arg0: i32) -> (i32, i32) {
    %c0_i32 = arith.constant 0 : i32
    %c0_i32_0 = arith.constant 0 : i32
    %c0_i32_1 = arith.constant 0 : i32
    return %c0_i32, %c0_i32_0 : i32, i32
  }
  func.func @transform_4(%arg0: i32) -> (i32, i32) {
    %c0_i32 = arith.constant 0 : i32
    %c0_i32_0 = arith.constant 0 : i32
    %c0_i32_1 = arith.constant 0 : i32
    return %c0_i32, %c0_i32_0 : i32, i32
  }
  func.func @transform_5(%arg0: i32) -> (i32, i32) {
    %c0_i32 = arith.constant 0 : i32
    %c0_i32_0 = arith.constant 0 : i32
    %c0_i32_1 = arith.constant 0 : i32
    return %c0_i32, %c0_i32_0 : i32, i32
  }
  func.func @transform_6(%arg0: i32) -> (i32, i32) {
    %c0_i32 = arith.constant 0 : i32
    %c0_i32_0 = arith.constant 0 : i32
    %c0_i32_1 = arith.constant 0 : i32
    return %c0_i32, %c0_i32_0 : i32, i32
  }
  func.func @transform_7(%arg0: i32) -> (i32, i32) {
    %c0_i32 = arith.constant 0 : i32
    %c0_i32_0 = arith.constant 0 : i32
    %c0_i32_1 = arith.constant 0 : i32
    return %c0_i32, %c0_i32_0 : i32, i32
  }
  func.func @transform_8(%arg0: i32) -> (i32, i32) {
    %c0_i32 = arith.constant 0 : i32
    %c0_i32_0 = arith.constant 0 : i32
    return %arg0, %c0_i32 : i32, i32
  }
  func.func @transform_9(%arg0: i32) -> (i32, i32) {
    %c0_i32 = arith.constant 0 : i32
    %c0_i32_0 = arith.constant 0 : i32
    return %c0_i32, %arg0 : i32, i32
  }
  func.func @transform_10(%arg0: i32) -> (i32, i32) {
    %c0_i32 = arith.constant 0 : i32
    %c0_i32_0 = arith.constant 0 : i32
    return %c0_i32, %arg0 : i32, i32
  }
}

</mosaic_0001>

<llo_original>
// kernel: tpu_custom_call.1
$region0: #{tpu_custom_call.1}
  #allocation0 [shape = 'u32[]', space=smem, size = 0x4, offset = 0x4, fixed_abs, tag = 'smem constant byte address 0x4 - core index']
  #allocation1 [shape = 'u32[144,128]{1,0:T(1,128)}', space=vmem, size = 0x12000, scoped, tag = 'internal scratch']
  %s0 = inlined_call_operand.vmem [shape: f32[16,16], index: 0, kind: input, shape index: {}]
  %s1 = inlined_call_operand.vmem [shape: f32[16,1], index: 1, kind: input, shape index: {}]
  %s2 = inlined_call_operand.vmem [shape: f32[4,16], index: 2, kind: input, shape index: {}]
  %s3 = inlined_call_operand.vmem [shape: f32[4,1], index: 3, kind: input, shape index: {}]
  %s4 = inlined_call_operand.vmem [shape: f32[4,4], index: 4, kind: input, shape index: {}]
  %s5 = inlined_call_operand.vmem [shape: f32[4,1], index: 5, kind: input, shape index: {}]
  %s6 = inlined_call_operand.vmem [shape: f32[16,4], index: 6, kind: input, shape index: {}]
  %s7 = inlined_call_operand.vmem [shape: f32[16,1], index: 7, kind: input, shape index: {}]
  %s8 = inlined_call_operand.vmem [shape: f32[384,16], index: 8, kind: input, shape index: {}]
  %s9 = inlined_call_operand.vmem [shape: f32[4,384], index: 9, kind: input, shape index: {}]
  %s10 = inlined_call_operand.hbm [shape: f32[16,384], index: 10, kind: output, shape index: {}]
  %s11 = sld [smem:[#allocation0]]
  $region73: #{tpu_custom_call.1} parent=0
    _
  %s13 = ssub.s32 1, %s11
  %s14 = scalar_select 0, %s13, %s11
  $region1: #{tpu_custom_call.1} parent=0
    #allocation2 [shape = 'u8[32768]{0}', space=vmem, size = 0x8000, scoped, tag = 'output window, operand 0']
    #allocation3 [shape = 's32[2]{0}', space=sflag, size = 0x8, scoped, tag = 'scoped memory for tpu_custom_call.1']
    %15 = vsyncpa [#allocation3], 0
    %s16 = scalar_lea.sflag [#allocation3], 1
    %17 = vsyncpa %s16, 0
    loop: start=0, step=1, limit=4
    $region2: #{tpu_custom_call.1} parent=1 // loop_pre_header
      _
    $region3: #{tpu_custom_call.1} parent=1 // loop_header
      %s19 = sphi 0, %s23
      %p20 = scmp.ge.s32.totalorder %s19, 4
      %s27 = sphi 0, %s27
      %s29 = sphi 0, %s27
      %s30 = sphi 0, %s29
      %s44 = sphi 0, %s30
      %s48 = sphi 0, %s48
      %s50 = sphi 0, %s48
      %s51 = sphi 0, %s50
      %s65 = sphi 0, %s51
      %s69 = sphi 0, %s69
      %s71 = sphi 0, %s69
      %s72 = sphi 0, %s71
      %s86 = sphi 0, %s72
      %s90 = sphi 0, %s90
      %s92 = sphi 0, %s90
      %s93 = sphi 0, %s92
      %s107 = sphi 0, %s93
      %s111 = sphi 0, %s111
      %s113 = sphi 0, %s111
      %s114 = sphi 0, %s113
      %s128 = sphi 0, %s114
      %s132 = sphi 0, %s132
      %s134 = sphi 0, %s132
      %s135 = sphi 0, %s134
      %s149 = sphi 0, %s135
      %s153 = sphi 0, %s153
      %s155 = sphi 0, %s153
      %s156 = sphi 0, %s155
      %s170 = sphi 0, %s156
      %s174 = sphi 0, %s174
      %s176 = sphi 0, %s174
      %s177 = sphi 0, %s176
      %s191 = sphi 0, %s177
      %s197 = sphi 0, %s199
      %s200 = sphi 0, %s197
      %s201 = sphi 0, %s200
      %s217 = sphi 0, %s201
      %s223 = sphi 0, %s225
      %s226 = sphi 0, %s223
      %s227 = sphi 0, %s226
      %s243 = sphi 0, %s227
      %s249 = sphi 0, %s251
      %s252 = sphi 0, %s249
      %s253 = sphi 0, %s252
      %s269 = sphi 0, %s253
    $region4: #{tpu_custom_call.1} parent=1 // loop_header_branch
      %22 = sbr.rel (%p20) target = $region8
    $region5: #{tpu_custom_call.1} parent=1 // loop_body
      %s24 = ssub.s32 %s19, 1
      %s25 = ssub.s32 %s19, 2
      %s26 = sadd.s32 %s19, 1
      %s28 = sadd.s32 %s27, 1
      %p31 = scmp.eq.s32.totalorder %s19, 1
      %p32 = scmp.ne.s32.totalorder %s27, %s29
      %p33 = scmp.eq.s32.totalorder %s19, 0
      %p34 = por %p32, %p33
      %p35 = scmp.ne.s32.totalorder %s27, %s29
      %p36 = scmp.eq.s32.totalorder %s24, 1
      %p37 = por %p35, %p36
      %p38 = scmp.ne.s32.totalorder %s29, %s30
      %p39 = scmp.eq.s32.totalorder %s24, 0
      %p40 = por %p38, %p39
      %p41 = scmp.ne.s32.totalorder %s29, %s30
      %p42 = scmp.eq.s32.totalorder %s25, 1
      %p43 = por %p41, %p42
      %p45 = scmp.ne.s32.totalorder %s30, %s44
      %p46 = scmp.eq.s32.totalorder %s25, 0
      %p47 = por %p45, %p46
      %s49 = sadd.s32 %s48, 1
      %p52 = scmp.eq.s32.totalorder %s19, 1
      %p53 = scmp.ne.s32.totalorder %s48, %s50
      %p54 = scmp.eq.s32.totalorder %s19, 0
      %p55 = por %p53, %p54
      %p56 = scmp.ne.s32.totalorder %s48, %s50
      %p57 = scmp.eq.s32.totalorder %s24, 1
      %p58 = por %p56, %p57
      %p59 = scmp.ne.s32.totalorder %s50, %s51
      %p60 = scmp.eq.s32.totalorder %s24, 0
      %p61 = por %p59, %p60
      %p62 = scmp.ne.s32.totalorder %s50, %s51
      %p63 = scmp.eq.s32.totalorder %s25, 1
      %p64 = por %p62, %p63
      %p66 = scmp.ne.s32.totalorder %s51, %s65
      %p67 = scmp.eq.s32.totalorder %s25, 0
      %p68 = por %p66, %p67
      %s70 = sadd.s32 %s69, 1
      %p73 = scmp.eq.s32.totalorder %s19, 1
      %p74 = scmp.ne.s32.totalorder %s69, %s71
      %p75 = scmp.eq.s32.totalorder %s19, 0
      %p76 = por %p74, %p75
      %p77 = scmp.ne.s32.totalorder %s69, %s71
      %p78 = scmp.eq.s32.totalorder %s24, 1
      %p79 = por %p77, %p78
      %p80 = scmp.ne.s32.totalorder %s71, %s72
      %p81 = scmp.eq.s32.totalorder %s24, 0
      %p82 = por %p80, %p81
      %p83 = scmp.ne.s32.totalorder %s71, %s72
      %p84 = scmp.eq.s32.totalorder %s25, 1
      %p85 = por %p83, %p84
      %p87 = scmp.ne.s32.totalorder %s72, %s86
      %p88 = scmp.eq.s32.totalorder %s25, 0
      %p89 = por %p87, %p88
      %s91 = sadd.s32 %s90, 1
      %p94 = scmp.eq.s32.totalorder %s19, 1
      %p95 = scmp.ne.s32.totalorder %s90, %s92
      %p96 = scmp.eq.s32.totalorder %s19, 0
      %p97 = por %p95, %p96
      %p98 = scmp.ne.s32.totalorder %s90, %s92
      %p99 = scmp.eq.s32.totalorder %s24, 1
      %p100 = por %p98, %p99
      %p101 = scmp.ne.s32.totalorder %s92, %s93
      %p102 = scmp.eq.s32.totalorder %s24, 0
      %p103 = por %p101, %p102
      %p104 = scmp.ne.s32.totalorder %s92, %s93
      %p105 = scmp.eq.s32.totalorder %s25, 1
      %p106 = por %p104, %p105
      %p108 = scmp.ne.s32.totalorder %s93, %s107
      %p109 = scmp.eq.s32.totalorder %s25, 0
      %p110 = por %p108, %p109
      %s112 = sadd.s32 %s111, 1
      %p115 = scmp.eq.s32.totalorder %s19, 1
      %p116 = scmp.ne.s32.totalorder %s111, %s113
      %p117 = scmp.eq.s32.totalorder %s19, 0
      %p118 = por %p116, %p117
      %p119 = scmp.ne.s32.totalorder %s111, %s113
      %p120 = scmp.eq.s32.totalorder %s24, 1
      %p121 = por %p119, %p120
      %p122 = scmp.ne.s32.totalorder %s113, %s114
      %p123 = scmp.eq.s32.totalorder %s24, 0
      %p124 = por %p122, %p123
      %p125 = scmp.ne.s32.totalorder %s113, %s114
      %p126 = scmp.eq.s32.totalorder %s25, 1
      %p127 = por %p125, %p126
      %p129 = scmp.ne.s32.totalorder %s114, %s128
      %p130 = scmp.eq.s32.totalorder %s25, 0
      %p131 = por %p129, %p130
      %s133 = sadd.s32 %s132, 1
      %p136 = scmp.eq.s32.totalorder %s19, 1
      %p137 = scmp.ne.s32.totalorder %s132, %s134
      %p138 = scmp.eq.s32.totalorder %s19, 0
      %p139 = por %p137, %p138
      %p140 = scmp.ne.s32.totalorder %s132, %s134
      %p141 = scmp.eq.s32.totalorder %s24, 1
      %p142 = por %p140, %p141
      %p143 = scmp.ne.s32.totalorder %s134, %s135
      %p144 = scmp.eq.s32.totalorder %s24, 0
      %p145 = por %p143, %p144
      %p146 = scmp.ne.s32.totalorder %s134, %s135
      %p147 = scmp.eq.s32.totalorder %s25, 1
      %p148 = por %p146, %p147
      %p150 = scmp.ne.s32.totalorder %s135, %s149
      %p151 = scmp.eq.s32.totalorder %s25, 0
      %p152 = por %p150, %p151
      %s154 = sadd.s32 %s153, 1
      %p157 = scmp.eq.s32.totalorder %s19, 1
      %p158 = scmp.ne.s32.totalorder %s153, %s155
      %p159 = scmp.eq.s32.totalorder %s19, 0
      %p160 = por %p158, %p159
      %p161 = scmp.ne.s32.totalorder %s153, %s155
      %p162 = scmp.eq.s32.totalorder %s24, 1
      %p163 = por %p161, %p162
      %p164 = scmp.ne.s32.totalorder %s155, %s156
      %p165 = scmp.eq.s32.totalorder %s24, 0
      %p166 = por %p164, %p165
      %p167 = scmp.ne.s32.totalorder %s155, %s156
      %p168 = scmp.eq.s32.totalorder %s25, 1
      %p169 = por %p167, %p168
      %p171 = scmp.ne.s32.totalorder %s156, %s170
      %p172 = scmp.eq.s32.totalorder %s25, 0
      %p173 = por %p171, %p172
      %s175 = sadd.s32 %s174, 1
      %p178 = scmp.eq.s32.totalorder %s19, 1
      %p179 = scmp.ne.s32.totalorder %s174, %s176
      %p180 = scmp.eq.s32.totalorder %s19, 0
      %p181 = por %p179, %p180
      %p182 = scmp.ne.s32.totalorder %s174, %s176
      %p183 = scmp.eq.s32.totalorder %s24, 1
      %p184 = por %p182, %p183
      %p185 = scmp.ne.s32.totalorder %s176, %s177
      %p186 = scmp.eq.s32.totalorder %s24, 0
      %p187 = por %p185, %p186
      %p188 = scmp.ne.s32.totalorder %s176, %s177
      %p189 = scmp.eq.s32.totalorder %s25, 1
      %p190 = por %p188, %p189
      %p192 = scmp.ne.s32.totalorder %s177, %s191
      %p193 = scmp.eq.s32.totalorder %s25, 0
      %p194 = por %p192, %p193
      %s195 = ssub.s32 %s19, %s26
      %p196 = scmp.eq.s32.totalorder %s195, 0
      %s198 = sadd.s32 %s197, 1
      %s199 = scalar_select %p196, %s197, %s198
      %p202 = pneg %p196
      %p203 = scmp.eq.s32.totalorder %s19, 1
      %p204 = por %p202, %p203
      %p205 = scmp.ne.s32.totalorder %s197, %s200
      %p206 = scmp.eq.s32.totalorder %s19, 0
      %p207 = por %p205, %p206
      %p208 = scmp.ne.s32.totalorder %s197, %s200
      %p209 = scmp.eq.s32.totalorder %s24, 1
      %p210 = por %p208, %p209
      %p211 = scmp.ne.s32.totalorder %s200, %s201
      %p212 = scmp.eq.s32.totalorder %s24, 0
      %p213 = por %p211, %p212
      %p214 = scmp.ne.s32.totalorder %s200, %s201
      %p215 = scmp.eq.s32.totalorder %s25, 1
      %p216 = por %p214, %p215
      %p218 = scmp.ne.s32.totalorder %s201, %s217
      %p219 = scmp.eq.s32.totalorder %s25, 0
      %p220 = por %p218, %p219
      %s221 = ssub.s32 %s19, %s26
      %p222 = scmp.eq.s32.totalorder %s221, 0
      %s224 = sadd.s32 %s223, 1
      %s225 = scalar_select %p222, %s223, %s224
      %p228 = pneg %p222
      %p229 = scmp.eq.s32.totalorder %s19, 1
      %p230 = por %p228, %p229
      %p231 = scmp.ne.s32.totalorder %s223, %s226
      %p232 = scmp.eq.s32.totalorder %s19, 0
      %p233 = por %p231, %p232
      %p234 = scmp.ne.s32.totalorder %s223, %s226
      %p235 = scmp.eq.s32.totalorder %s24, 1
      %p236 = por %p234, %p235
      %p237 = scmp.ne.s32.totalorder %s226, %s227
      %p238 = scmp.eq.s32.totalorder %s24, 0
      %p239 = por %p237, %p238
      %p240 = scmp.ne.s32.totalorder %s226, %s227
      %p241 = scmp.eq.s32.totalorder %s25, 1
      %p242 = por %p240, %p241
      %p244 = scmp.ne.s32.totalorder %s227, %s243
      %p245 = scmp.eq.s32.totalorder %s25, 0
      %p246 = por %p244, %p245
      %s247 = ssub.s32 %s19, %s26
      %p248 = scmp.eq.s32.totalorder %s247, 0
      %s250 = sadd.s32 %s249, 1
      %s251 = scalar_select %p248, %s249, %s250
      %p254 = pneg %p248
      %p255 = scmp.eq.s32.totalorder %s19, 1
      %p256 = por %p254, %p255
      %p257 = scmp.ne.s32.totalorder %s249, %s252
      %p258 = scmp.eq.s32.totalorder %s19, 0
      %p259 = por %p257, %p258
      %p260 = scmp.ne.s32.totalorder %s249, %s252
      %p261 = scmp.eq.s32.totalorder %s24, 1
      %p262 = por %p260, %p261
      %p263 = scmp.ne.s32.totalorder %s252, %s253
      %p264 = scmp.eq.s32.totalorder %s24, 0
      %p265 = por %p263, %p264
      %p266 = scmp.ne.s32.totalorder %s252, %s253
      %p267 = scmp.eq.s32.totalorder %s25, 1
      %p268 = por %p266, %p267
      %p270 = scmp.ne.s32.totalorder %s253, %s269
      %p271 = scmp.eq.s32.totalorder %s25, 0
      %p272 = por %p270, %p271
      %p273 = scmp.le.s32.totalorder 1, %s19
      %p274 = scmp.lt.s32.totalorder %s19, 3
      %p275 = pnand %p273, %p274
      %p276 = pneg %p275
      // Predicated region
      $region9: #{tpu_custom_call.1} parent=5 // pred_check
        _
      $region10: #{tpu_custom_call.1} parent=5 // pred_check_branch
        %278 = sbr.rel (%p275) target = $region12
      $region11: #{tpu_custom_call.1} parent=5 // pred_region
        %s279 = ssub.s32 %s19, 1
        // Predicated region
        $region13: #{tpu_custom_call.1} parent=11 // pred_check
          %p280 = pneg %p40
        $region14: #{tpu_custom_call.1} parent=11 // pred_check_branch
          %282 = sbr.rel (%p280) target = $region16
        $region15: #{tpu_custom_call.1} parent=11 // pred_region
          _
        $region16: #{tpu_custom_call.1} parent=11 // pred_fallthru
          _
        // Predicated region
        $region17: #{tpu_custom_call.1} parent=11 // pred_check
          %p283 = pneg %p61
        $region18: #{tpu_custom_call.1} parent=11 // pred_check_branch
          %285 = sbr.rel (%p283) target = $region20
        $region19: #{tpu_custom_call.1} parent=11 // pred_region
          _
        $region20: #{tpu_custom_call.1} parent=11 // pred_fallthru
          _
        // Predicated region
        $region21: #{tpu_custom_call.1} parent=11 // pred_check
          %p286 = pneg %p82
        $region22: #{tpu_custom_call.1} parent=11 // pred_check_branch
          %288 = sbr.rel (%p286) target = $region24
        $region23: #{tpu_custom_call.1} parent=11 // pred_region
          _
        $region24: #{tpu_custom_call.1} parent=11 // pred_fallthru
          _
        // Predicated region
        $region25: #{tpu_custom_call.1} parent=11 // pred_check
          %p289 = pneg %p103
        $region26: #{tpu_custom_call.1} parent=11 // pred_check_branch
          %291 = sbr.rel (%p289) target = $region28
        $region27: #{tpu_custom_call.1} parent=11 // pred_region
          _
        $region28: #{tpu_custom_call.1} parent=11 // pred_fallthru
          _
        // Predicated region
        $region29: #{tpu_custom_call.1} parent=11 // pred_check
          %p292 = pneg %p124
        $region30: #{tpu_custom_call.1} parent=11 // pred_check_branch
          %294 = sbr.rel (%p292) target = $region32
        $region31: #{tpu_custom_call.1} parent=11 // pred_region
          _
        $region32: #{tpu_custom_call.1} parent=11 // pred_fallthru
          _
        // Predicated region
        $region33: #{tpu_custom_call.1} parent=11 // pred_check
          %p295 = pneg %p145
        $region34: #{tpu_custom_call.1} parent=11 // pred_check_branch
          %297 = sbr.rel (%p295) target = $region36
        $region35: #{tpu_custom_call.1} parent=11 // pred_region
          _
        $region36: #{tpu_custom_call.1} parent=11 // pred_fallthru
          _
        // Predicated region
        $region37: #{tpu_custom_call.1} parent=11 // pred_check
          %p298 = pneg %p166
        $region38: #{tpu_custom_call.1} parent=11 // pred_check_branch
          %300 = sbr.rel (%p298) target = $region40
        $region39: #{tpu_custom_call.1} parent=11 // pred_region
          _
        $region40: #{tpu_custom_call.1} parent=11 // pred_fallthru
          _
        // Predicated region
        $region41: #{tpu_custom_call.1} parent=11 // pred_check
          %p301 = pneg %p187
        $region42: #{tpu_custom_call.1} parent=11 // pred_check_branch
          %303 = sbr.rel (%p301) target = $region44
        $region43: #{tpu_custom_call.1} parent=11 // pred_region
          _
        $region44: #{tpu_custom_call.1} parent=11 // pred_fallthru
          _
      $region12: #{tpu_custom_call.1} parent=5 // pred_fallthru
        _
      %p304 = scmp.lt.s32.totalorder %s19, 2
      // Predicated region
      $region45: #{tpu_custom_call.1} parent=5 // pred_check
        %p305 = pneg %p304
      $region46: #{tpu_custom_call.1} parent=5 // pred_check_branch
        %307 = sbr.rel (%p305) target = $region48
      $region47: #{tpu_custom_call.1} parent=5 // pred_region
        // Predicated region
        $region49: #{tpu_custom_call.1} parent=47 // pred_check
          %p308 = pneg %p207
        $region50: #{tpu_custom_call.1} parent=47 // pred_check_branch
          %310 = sbr.rel (%p308) target = $region52
        $region51: #{tpu_custom_call.1} parent=47 // pred_region
          %s311 = smul.u32 32, %s19
          %s312 = ssub.s32 48, %s311
          %p313 = scmp.lt.s32.totalorder %s312, 32
          %s314 = scalar_select %p313, %s312, 32
          %s315 = smul.u32 128, %s314
          %p316 = scmp.lt.s32.totalorder %s311, 47
          %s317 = scalar_select %p316, %s311, 47
          %s318 = smul.addr %s317, 8
          %s319 = scalar_lea.vmem %s8, %s318
          %s320 = smul.u32 32, %s19
          %s321 = ssub.s32 48, %s320
          %p322 = scmp.lt.s32.totalorder %s321, 32
          %s323 = scalar_select %p322, %s321, 32
          %s324 = smul.u32 128, %s323
        $region52: #{tpu_custom_call.1} parent=47 // pred_fallthru
          _
        // Predicated region
        $region53: #{tpu_custom_call.1} parent=47 // pred_check
          %p325 = pneg %p233
        $region54: #{tpu_custom_call.1} parent=47 // pred_check_branch
          %327 = sbr.rel (%p325) target = $region56
        $region55: #{tpu_custom_call.1} parent=47 // pred_region
          %s328 = smul.u32 2, %s19
          %s329 = ssub.s32 3, %s328
          %p330 = scmp.lt.s32.totalorder %s329, 2
          %s331 = scalar_select %p330, %s329, 2
          %s332 = smul.u32 64, %s331
          %p333 = scmp.lt.s32.totalorder %s328, 2
          %s334 = scalar_select %p333, %s328, 2
          %s335 = smul.addr %s334, 4
          %s336 = scalar_lea.vmem %s9, %s335
          %s337 = smul.u32 2, %s19
          %s338 = ssub.s32 3, %s337
          %p339 = scmp.lt.s32.totalorder %s338, 2
          %s340 = scalar_select %p339, %s338, 2
          %s341 = smul.u32 64, %s340
        $region56: #{tpu_custom_call.1} parent=47 // pred_fallthru
          _
      $region48: #{tpu_custom_call.1} parent=5 // pred_fallthru
        _
      %p342 = scmp.le.s32.totalorder 1, %s19
      %p343 = scmp.lt.s32.totalorder %s19, 3
      %p344 = pnand %p342, %p343
      %p345 = pneg %p344
      // Predicated region
      $region57: #{tpu_custom_call.1} parent=5 // pred_check
        _
      $region58: #{tpu_custom_call.1} parent=5 // pred_check_branch
        %347 = sbr.rel (%p344) target = $region60
      $region59: #{tpu_custom_call.1} parent=5 // pred_region
        %s348 = ssub.s32 %s19, 1
        %p349 = pneg %p40
        %p350 = pneg %p37
        %p351 = pneg %p61
        %p352 = pneg %p58
        %p353 = pneg %p82
        %p354 = pneg %p79
        %p355 = pneg %p103
        %p356 = pneg %p100
        %p357 = pneg %p124
        %p358 = pneg %p121
        %p359 = pneg %p145
        %p360 = pneg %p142
        %p361 = pneg %p166
        %p362 = pneg %p163
        %p363 = pneg %p187
        %p364 = pneg %p184
        %s365 = smul.u32 32, %s24
        %s366 = ssub.s32 48, %s365
        %p367 = scmp.lt.s32.totalorder %s366, 32
        %s368 = scalar_select %p367, %s366, 32
        %s369 = smul.u32 128, %s368
        %p370 = scmp.lt.s32.totalorder %s365, 47
        %s371 = scalar_select %p370, %s365, 47
        %s372 = smul.addr %s371, 8
        %s373 = scalar_lea.vmem %s8, %s372
        %p374 = pneg %p213
        %p375 = pneg %p210
        %s376 = smul.u32 2, %s24
        %s377 = ssub.s32 3, %s376
        %p378 = scmp.lt.s32.totalorder %s377, 2
        %s379 = scalar_select %p378, %s377, 2
        %s380 = smul.u32 64, %s379
        %p381 = scmp.lt.s32.totalorder %s376, 2
        %s382 = scalar_select %p381, %s376, 2
        %s383 = smul.addr %s382, 4
        %s384 = scalar_lea.vmem %s9, %s383
        %p385 = pneg %p239
        %p386 = pneg %p236
        %p387 = pneg %p265
        %p388 = pneg %p262
        %s389 = sand.u32 %s252, 1
        %s390 = scalar_lea.sflag [#allocation3], %s389
        %s391 = sand.u32 %s252, 1
        %s392 = smul.addr %s391, 32
        %s393 = scalar_lea.vmem [#allocation2], %s392
        %s394 = smul.u32 32, %s24
        %s395 = ssub.s32 48, %s394
        %p396 = scmp.lt.s32.totalorder %s395, 32
        %s397 = scalar_select %p396, %s395, 32
        %s398 = smul.u32 128, %s397
        %p399 = scmp.lt.s32.totalorder %s394, 47
        %s400 = scalar_select %p399, %s394, 47
        %s401 = smul.addr %s400, 8
        %s402 = scalar_lea.vmem %s8, %s401
        %s403 = smul.u32 32, %s24
        %s404 = ssub.s32 48, %s403
        %p405 = scmp.lt.s32.totalorder %s404, 32
        %s406 = scalar_select %p405, %s404, 32
        %s407 = smul.u32 128, %s406
        %s408 = smul.u32 2, %s24
        %s409 = ssub.s32 3, %s408
        %p410 = scmp.lt.s32.totalorder %s409, 2
        %s411 = scalar_select %p410, %s409, 2
        %s412 = smul.u32 64, %s411
        %p413 = scmp.lt.s32.totalorder %s408, 2
        %s414 = scalar_select %p413, %s408, 2
        %s415 = smul.addr %s414, 4
        %s416 = scalar_lea.vmem %s9, %s415
        %s417 = smul.u32 2, %s24
        %s418 = ssub.s32 3, %s417
        %p419 = scmp.lt.s32.totalorder %s418, 2
        %s420 = scalar_select %p419, %s418, 2
        %s421 = smul.u32 64, %s420
        %s422 = smul.u32 2, %s24
        %s423 = ssub.s32 3, %s422
        %p424 = scmp.lt.s32.totalorder %s423, 2
        %s425 = scalar_select %p424, %s423, 2
        %s426 = smul.u32 256, %s425
        %v427 = vld [vmem:[%s402] sm:$0xff]
        %v428 = vld [vmem:[%s402 + $0x8] sm:$0xff]
        %v429 = vld [vmem:[%s402 + $0x10] sm:$0xff]
        %v430 = vld [vmem:[%s402 + $0x18] sm:$0xff]
        %v431 = vld [vmem:[%s402 + $0x20] sm:$0xff]
        %v432 = vld [vmem:[%s402 + $0x28] sm:$0xff]
        %v433 = vld [vmem:[%s402 + $0x30] sm:$0xff]
        %v434 = vld [vmem:[%s402 + $0x38] sm:$0xff]
        %v435 = vld [vmem:[%s402 + $0x40] sm:$0xff]
        %v436 = vld [vmem:[%s402 + $0x48] sm:$0xff]
        %v437 = vld [vmem:[%s402 + $0x50] sm:$0xff]
        %v438 = vld [vmem:[%s402 + $0x58] sm:$0xff]
        %v439 = vld [vmem:[%s402 + $0x60] sm:$0xff]
        %v440 = vld [vmem:[%s402 + $0x68] sm:$0xff]
        %v441 = vld [vmem:[%s402 + $0x70] sm:$0xff]
        %v442 = vld [vmem:[%s402 + $0x78] sm:$0xff]
        %v443 = vld [vmem:[%s402 + $0x80] sm:$0xff]
        %v444 = vld [vmem:[%s402 + $0x88] sm:$0xff]
        %v445 = vld [vmem:[%s402 + $0x90] sm:$0xff]
        %v446 = vld [vmem:[%s402 + $0x98] sm:$0xff]
        %v447 = vld [vmem:[%s402 + $0xa0] sm:$0xff]
        %v448 = vld [vmem:[%s402 + $0xa8] sm:$0xff]
        %v449 = vld [vmem:[%s402 + $0xb0] sm:$0xff]
        %v450 = vld [vmem:[%s402 + $0xb8] sm:$0xff]
        %v451 = vld [vmem:[%s402 + $0xc0] sm:$0xff]
        %v452 = vld [vmem:[%s402 + $0xc8] sm:$0xff]
        %v453 = vld [vmem:[%s402 + $0xd0] sm:$0xff]
        %v454 = vld [vmem:[%s402 + $0xd8] sm:$0xff]
        %v455 = vld [vmem:[%s402 + $0xe0] sm:$0xff]
        %v456 = vld [vmem:[%s402 + $0xe8] sm:$0xff]
        %v457 = vld [vmem:[%s402 + $0xf0] sm:$0xff]
        %v458 = vld [vmem:[%s402 + $0xf8] sm:$0xff]
        %v459 = vld [vmem:[%s0] sm:$0xff]
        %v460 = vld [vmem:[%s0 + $0x8] sm:$0xff]
        %v461 = vld [vmem:[%s1] sm:$0xff]
        %v462 = vld [vmem:[%s1 + $0x8] sm:$0xff]
        %464 = vset.pattern.permute.xlu0 0
        %465 = vperm.xlu0 %464, %v461
        %v466 = vpop.permute.xlu0 %465
        %469 = vset.pattern.permute.xlu0 0
        %470 = vperm.xlu0 %469, %v462
        %v471 = vpop.permute.xlu0 %470
        %vm473 = vcmask 130048
        %v475 = vsel %vm473, %v459, 0
        %v478 = vsel %vm473, %v460, 0
        %v481 = vsel %vm473, %v427, 0
        %v484 = vsel %vm473, %v428, 0
        %v487 = vsel %vm473, %v429, 0
        %v490 = vsel %vm473, %v430, 0
        %v493 = vsel %vm473, %v431, 0
        %v496 = vsel %vm473, %v432, 0
        %v499 = vsel %vm473, %v433, 0
        %v502 = vsel %vm473, %v434, 0
        %v505 = vsel %vm473, %v435, 0
        %v508 = vsel %vm473, %v436, 0
        %v511 = vsel %vm473, %v437, 0
        %v514 = vsel %vm473, %v438, 0
        %v517 = vsel %vm473, %v439, 0
        %v520 = vsel %vm473, %v440, 0
        %v523 = vsel %vm473, %v441, 0
        %v526 = vsel %vm473, %v442, 0
        %v529 = vsel %vm473, %v443, 0
        %v532 = vsel %vm473, %v444, 0
        %v535 = vsel %vm473, %v445, 0
        %v538 = vsel %vm473, %v446, 0
        %v541 = vsel %vm473, %v447, 0
        %v544 = vsel %vm473, %v448, 0
        %v547 = vsel %vm473, %v449, 0
        %v550 = vsel %vm473, %v450, 0
        %v553 = vsel %vm473, %v451, 0
        %v556 = vsel %vm473, %v452, 0
        %v559 = vsel %vm473, %v453, 0
        %v562 = vsel %vm473, %v454, 0
        %v565 = vsel %vm473, %v455, 0
        %v568 = vsel %vm473, %v456, 0
        %v571 = vsel %vm473, %v457, 0
        %v574 = vsel %vm473, %v458, 0
        %576 = vmatprep.subr.mxu0 0.0
        %577 = vmatpush1.xpose.msra.mxu0 %v481
        %578 = vmatprep.subr.mxu0 0.0
        %579 = vmatpush1.xpose.msra.mxu0 %v484
        %580 = vmatprep.subr.mxu0 0.0
        %581 = vmatpush1.xpose.msra.mxu0 %v487
        %582 = vmatprep.subr.mxu0 0.0
        %583 = vmatpush1.xpose.msra.mxu0 %v490
        %584 = vmatprep.subr.mxu0 0.0
        %585 = vmatpush1.xpose.msra.mxu0 %v493
        %586 = vmatprep.subr.mxu0 0.0
        %587 = vmatpush1.xpose.msra.mxu0 %v496
        %588 = vmatprep.subr.mxu0 0.0
        %589 = vmatpush1.xpose.msra.mxu0 %v499
        %590 = vmatprep.subr.mxu0 0.0
        %591 = vmatpush1.xpose.msra.mxu0 %v502
        %592 = vmatprep.subr.mxu0 0.0
        %593 = vmatpush1.xpose.msra.mxu0 %v505
        %594 = vmatprep.subr.mxu0 0.0
        %595 = vmatpush1.xpose.msra.mxu0 %v508
        %596 = vmatprep.subr.mxu0 0.0
        %597 = vmatpush1.xpose.msra.mxu0 %v511
        %598 = vmatprep.subr.mxu0 0.0
        %599 = vmatpush1.xpose.msra.mxu0 %v514
        %600 = vmatprep.subr.mxu0 0.0
        %601 = vmatpush1.xpose.msra.mxu0 %v517
        %602 = vmatprep.subr.mxu0 0.0
        %603 = vmatpush1.xpose.msra.mxu0 %v520
        %604 = vmatprep.subr.mxu0 0.0
        %605 = vmatpush1.xpose.msra.mxu0 %v523
        %606 = vmatprep.subr.mxu0 0.0
        %607 = vmatpush1.xpose.msra.mxu0 %v526
        %608 = vmatprep.subr.mxu0 0.0
        %609 = vmatpush1.xpose.msra.mxu0 %v529
        %610 = vmatprep.subr.mxu0 0.0
        %611 = vmatpush1.xpose.msra.mxu0 %v532
        %612 = vmatprep.subr.mxu0 0.0
        %613 = vmatpush1.xpose.msra.mxu0 %v535
        %614 = vmatprep.subr.mxu0 0.0
        %615 = vmatpush1.xpose.msra.mxu0 %v538
        %616 = vmatprep.subr.mxu0 0.0
        %617 = vmatpush1.xpose.msra.mxu0 %v541
        %618 = vmatprep.subr.mxu0 0.0
        %619 = vmatpush1.xpose.msra.mxu0 %v544
        %620 = vmatprep.subr.mxu0 0.0
        %621 = vmatpush1.xpose.msra.mxu0 %v547
        %622 = vmatprep.subr.mxu0 0.0
        %623 = vmatpush1.xpose.msra.mxu0 %v550
        %624 = vmatprep.subr.mxu0 0.0
        %625 = vmatpush1.xpose.msra.mxu0 %v553
        %626 = vmatprep.subr.mxu0 0.0
        %627 = vmatpush1.xpose.msra.mxu0 %v556
        %628 = vmatprep.subr.mxu0 0.0
        %629 = vmatpush1.xpose.msra.mxu0 %v559
        %630 = vmatprep.subr.mxu0 0.0
        %631 = vmatpush1.xpose.msra.mxu0 %v562
        %632 = vmatprep.subr.mxu0 0.0
        %633 = vmatpush1.xpose.msra.mxu0 %v565
        %634 = vmatprep.subr.mxu0 0.0
        %635 = vmatpush1.xpose.msra.mxu0 %v568
        %636 = vmatprep.subr.mxu0 0.0
        %637 = vmatpush1.xpose.msra.mxu0 %v571
        %638 = vmatprep.subr.mxu0 0.0
        %639 = vmatpush1.xpose.msra.mxu0 %v574
        %640 = vmatprep.mubr.f32.mxu0 0.0
        %641 = vmatmul.mubr.f32.gmra.mrb[0].mxu0 %v475
        %v642 = vpop.f32.mrb[0].mxu0
        %v643 = vadd.f32 %v466, %v642
        %v644 = vpop.f32.mrb[0].mxu0
        %v645 = vadd.f32 %v466, %v644
        %646 = vmatprep.mubr.f32.mxu0 0.0
        %647 = vmatmul.mubr.f32.gmra.mrb[0].mxu0 %v478
        %v648 = vpop.f32.mrb[0].mxu0
        %v649 = vadd.f32 %v471, %v648
        %v650 = vpop.f32.mrb[0].mxu0
        %v651 = vadd.f32 %v471, %v650
        %652 = vdwg.mxu0
        %v653 = vmax.f32 %v643, 0.0
        %v654 = vmax.f32 %v645, 0.0
        %v655 = vmax.f32 %v649, 0.0
        %v656 = vmax.f32 %v651, 0.0
        %v657 = vld [vmem:[%s2] sm:$0xf]
        %v658 = vld [vmem:[%s3] sm:$0xf]
        %660 = vset.pattern.permute.xlu0 0
        %661 = vperm.xlu0 %660, %v658
        %v662 = vpop.permute.xlu0 %661
        %v665 = vsel %vm473, %v657, 0
        %667 = vmatprep.subr.mxu0 %v654
        %668 = vmatpush1.msra.mxu0 %v653
        %669 = vmatprep.subr.mxu0 %v656
        %670 = vmatpush1.msra.mxu0 %v655
        %671 = vmatprep.subr.mxu0 0.0
        %672 = vmatpush1.msra.mxu0 0.0
        %673 = vmatprep.subr.mxu0 0.0
        %674 = vmatpush1.msra.mxu0 0.0
        %675 = vmatprep.subr.mxu0 0.0
        %676 = vmatpush1.msra.mxu0 0.0
        %677 = vmatprep.subr.mxu0 0.0
        %678 = vmatpush1.msra.mxu0 0.0
        %679 = vmatprep.subr.mxu0 0.0
        %680 = vmatpush1.msra.mxu0 0.0
        %681 = vmatprep.subr.mxu0 0.0
        %682 = vmatpush1.msra.mxu0 0.0
        %683 = vmatprep.subr.mxu0 0.0
        %684 = vmatpush1.msra.mxu0 0.0
        %685 = vmatprep.subr.mxu0 0.0
        %686 = vmatpush1.msra.mxu0 0.0
        %687 = vmatprep.subr.mxu0 0.0
        %688 = vmatpush1.msra.mxu0 0.0
        %689 = vmatprep.subr.mxu0 0.0
        %690 = vmatpush1.msra.mxu0 0.0
        %691 = vmatprep.subr.mxu0 0.0
        %692 = vmatpush1.msra.mxu0 0.0
        %693 = vmatprep.subr.mxu0 0.0
        %694 = vmatpush1.msra.mxu0 0.0
        %695 = vmatprep.subr.mxu0 0.0
        %696 = vmatpush1.msra.mxu0 0.0
        %697 = vmatprep.subr.mxu0 0.0
        %698 = vmatpush1.msra.mxu0 0.0
        %699 = vmatprep.subr.mxu0 0.0
        %700 = vmatpush1.msra.mxu0 0.0
        %701 = vmatprep.subr.mxu0 0.0
        %702 = vmatpush1.msra.mxu0 0.0
        %703 = vmatprep.subr.mxu0 0.0
        %704 = vmatpush1.msra.mxu0 0.0
        %705 = vmatprep.subr.mxu0 0.0
        %706 = vmatpush1.msra.mxu0 0.0
        %707 = vmatprep.subr.mxu0 0.0
        %708 = vmatpush1.msra.mxu0 0.0
        %709 = vmatprep.subr.mxu0 0.0
        %710 = vmatpush1.msra.mxu0 0.0
        %711 = vmatprep.subr.mxu0 0.0
        %712 = vmatpush1.msra.mxu0 0.0
        %713 = vmatprep.subr.mxu0 0.0
        %714 = vmatpush1.msra.mxu0 0.0
        %715 = vmatprep.subr.mxu0 0.0
        %716 = vmatpush1.msra.mxu0 0.0
        %717 = vmatprep.subr.mxu0 0.0
        %718 = vmatpush1.msra.mxu0 0.0
        %719 = vmatprep.subr.mxu0 0.0
        %720 = vmatpush1.msra.mxu0 0.0
        %721 = vmatprep.subr.mxu0 0.0
        %722 = vmatpush1.msra.mxu0 0.0
        %723 = vmatprep.subr.mxu0 0.0
        %724 = vmatpush1.msra.mxu0 0.0
        %725 = vmatprep.subr.mxu0 0.0
        %726 = vmatpush1.msra.mxu0 0.0
        %727 = vmatprep.subr.mxu0 0.0
        %728 = vmatpush1.msra.mxu0 0.0
        %729 = vmatprep.subr.mxu0 0.0
        %730 = vmatpush1.msra.mxu0 0.0
        %731 = vmatprep.mubr.f32.mxu0 0.0
        %732 = vmatmul.mubr.f32.gmra.mrb[0].mxu0 %v665
        %v733 = vpop.f32.mrb[0].mxu0
        %v734 = vadd.f32 %v662, %v733
        %v735 = vpop.f32.mrb[0].mxu0
        %v736 = vadd.f32 %v662, %v735
        %737 = vdwg.mxu0
        %v738 = vmul.f32 %v734, %v734
        %v739 = vmul.f32 %v736, %v736
        %vm740 = vcmask 1043456
        %v741 = vsel %vm740, %v738, 0.0
        %v742 = vrot.slane %v741, 4
        %v743 = vadd.f32 %v741, %v742
        %v744 = vrot.slane %v743, 2
        %v745 = vadd.f32 %v743, %v744
        %v746 = vrot.slane %v745, 1
        %v747 = vadd.f32 %v745, %v746
        %v748 = vsel %vm740, %v739, 0.0
        %v749 = vrot.slane %v748, 4
        %v750 = vadd.f32 %v748, %v749
        %v751 = vrot.slane %v750, 2
        %v752 = vadd.f32 %v750, %v751
        %v753 = vrot.slane %v752, 1
        %v754 = vadd.f32 %v752, %v753
        %v755 = vrsqrt.pop %v747
        %v756 = vrsqrt.pop %v754
        %v757 = vmul.f32 %v755, 256.0
        %v758 = vmul.f32 %v756, 256.0
        %v759 = vmul.f32 %v734, %v757
        %v760 = vmul.f32 %v736, %v758
        %v761 = vld [vmem:[%s416] sm:$0xff]
        %v763 = vcombine.high %v761, %v761
        %v765 = vadd.f32 %v759, %v761
        %v766 = vadd.f32 %v760, %v763
        %v767 = vld [vmem:[%s4] sm:$0xf]
        %v768 = vld [vmem:[%s5] sm:$0xf]
        %770 = vset.pattern.permute.xlu0 0
        %771 = vperm.xlu0 %770, %v768
        %v772 = vpop.permute.xlu0 %771
        %vm774 = vcmask 31744
        %v776 = vsel %vm774, %v767, 0
        %v779 = vsel %vm740, %v765, 0
        %v782 = vsel %vm740, %v766, 0
        %784 = vmatprep.subr.mxu0 %v782
        %785 = vmatpush1.msra.mxu0 %v779
        %786 = vmatprep.subr.mxu0 0.0
        %787 = vmatpush1.msra.mxu0 0.0
        %788 = vmatprep.subr.mxu0 0.0
        %789 = vmatpush1.msra.mxu0 0.0
        %790 = vmatprep.subr.mxu0 0.0
        %791 = vmatpush1.msra.mxu0 0.0
        %792 = vmatprep.subr.mxu0 0.0
        %793 = vmatpush1.msra.mxu0 0.0
        %794 = vmatprep.subr.mxu0 0.0
        %795 = vmatpush1.msra.mxu0 0.0
        %796 = vmatprep.subr.mxu0 0.0
        %797 = vmatpush1.msra.mxu0 0.0
        %798 = vmatprep.subr.mxu0 0.0
        %799 = vmatpush1.msra.mxu0 0.0
        %800 = vmatprep.subr.mxu0 0.0
        %801 = vmatpush1.msra.mxu0 0.0
        %802 = vmatprep.subr.mxu0 0.0
        %803 = vmatpush1.msra.mxu0 0.0
        %804 = vmatprep.subr.mxu0 0.0
        %805 = vmatpush1.msra.mxu0 0.0
        %806 = vmatprep.subr.mxu0 0.0
        %807 = vmatpush1.msra.mxu0 0.0
        %808 = vmatprep.subr.mxu0 0.0
        %809 = vmatpush1.msra.mxu0 0.0
        %810 = vmatprep.subr.mxu0 0.0
        %811 = vmatpush1.msra.mxu0 0.0
        %812 = vmatprep.subr.mxu0 0.0
        %813 = vmatpush1.msra.mxu0 0.0
        %814 = vmatprep.subr.mxu0 0.0
        %815 = vmatpush1.msra.mxu0 0.0
        %816 = vmatprep.subr.mxu0 0.0
        %817 = vmatpush1.msra.mxu0 0.0
        %818 = vmatprep.subr.mxu0 0.0
        %819 = vmatpush1.msra.mxu0 0.0
        %820 = vmatprep.subr.mxu0 0.0
        %821 = vmatpush1.msra.mxu0 0.0
        %822 = vmatprep.subr.mxu0 0.0
        %823 = vmatpush1.msra.mxu0 0.0
        %824 = vmatprep.subr.mxu0 0.0
        %825 = vmatpush1.msra.mxu0 0.0
        %826 = vmatprep.subr.mxu0 0.0
        %827 = vmatpush1.msra.mxu0 0.0
        %828 = vmatprep.subr.mxu0 0.0
        %829 = vmatpush1.msra.mxu0 0.0
        %830 = vmatprep.subr.mxu0 0.0
        %831 = vmatpush1.msra.mxu0 0.0
        %832 = vmatprep.subr.mxu0 0.0
        %833 = vmatpush1.msra.mxu0 0.0
        %834 = vmatprep.subr.mxu0 0.0
        %835 = vmatpush1.msra.mxu0 0.0
        %836 = vmatprep.subr.mxu0 0.0
        %837 = vmatpush1.msra.mxu0 0.0
        %838 = vmatprep.subr.mxu0 0.0
        %839 = vmatpush1.msra.mxu0 0.0
        %840 = vmatprep.subr.mxu0 0.0
        %841 = vmatpush1.msra.mxu0 0.0
        %842 = vmatprep.subr.mxu0 0.0
        %843 = vmatpush1.msra.mxu0 0.0
        %844 = vmatprep.subr.mxu0 0.0
        %845 = vmatpush1.msra.mxu0 0.0
        %846 = vmatprep.subr.mxu0 0.0
        %847 = vmatpush1.msra.mxu0 0.0
        %848 = vmatprep.mubr.f32.mxu0 0.0
        %849 = vmatmul.mubr.f32.gmra.mrb[0].mxu0 %v776
        %v850 = vpop.f32.mrb[0].mxu0
        %v851 = vadd.f32 %v772, %v850
        %v852 = vpop.f32.mrb[0].mxu0
        %v853 = vadd.f32 %v772, %v852
        %854 = vdwg.mxu0
        %v855 = vmax.f32 %v851, 0.0
        %v856 = vmax.f32 %v853, 0.0
        %v857 = vld [vmem:[%s6] sm:$0xff]
        %v858 = vld [vmem:[%s6 + $0x8] sm:$0xff]
        %v859 = vld [vmem:[%s7] sm:$0xff]
        %v860 = vld [vmem:[%s7 + $0x8] sm:$0xff]
        %862 = vset.pattern.permute.xlu0 0
        %863 = vperm.xlu0 %862, %v859
        %v864 = vpop.permute.xlu0 %863
        %867 = vset.pattern.permute.xlu0 0
        %868 = vperm.xlu0 %867, %v860
        %v869 = vpop.permute.xlu0 %868
        %v872 = vsel %vm774, %v857, 0
        %v875 = vsel %vm774, %v858, 0
        %v878 = vsel %vm740, %v855, 0
        %v881 = vsel %vm740, %v856, 0
        %883 = vmatprep.subr.mxu0 %v881
        %884 = vmatpush1.msra.mxu0 %v878
        %885 = vmatprep.subr.mxu0 0.0
        %886 = vmatpush1.msra.mxu0 0.0
        %887 = vmatprep.subr.mxu0 0.0
        %888 = vmatpush1.msra.mxu0 0.0
        %889 = vmatprep.subr.mxu0 0.0
        %890 = vmatpush1.msra.mxu0 0.0
        %891 = vmatprep.subr.mxu0 0.0
        %892 = vmatpush1.msra.mxu0 0.0
        %893 = vmatprep.subr.mxu0 0.0
        %894 = vmatpush1.msra.mxu0 0.0
        %895 = vmatprep.subr.mxu0 0.0
        %896 = vmatpush1.msra.mxu0 0.0
        %897 = vmatprep.subr.mxu0 0.0
        %898 = vmatpush1.msra.mxu0 0.0
        %899 = vmatprep.subr.mxu0 0.0
        %900 = vmatpush1.msra.mxu0 0.0
        %901 = vmatprep.subr.mxu0 0.0
        %902 = vmatpush1.msra.mxu0 0.0
        %903 = vmatprep.subr.mxu0 0.0
        %904 = vmatpush1.msra.mxu0 0.0
        %905 = vmatprep.subr.mxu0 0.0
        %906 = vmatpush1.msra.mxu0 0.0
        %907 = vmatprep.subr.mxu0 0.0
        %908 = vmatpush1.msra.mxu0 0.0
        %909 = vmatprep.subr.mxu0 0.0
        %910 = vmatpush1.msra.mxu0 0.0
        %911 = vmatprep.subr.mxu0 0.0
        %912 = vmatpush1.msra.mxu0 0.0
        %913 = vmatprep.subr.mxu0 0.0
        %914 = vmatpush1.msra.mxu0 0.0
        %915 = vmatprep.subr.mxu0 0.0
        %916 = vmatpush1.msra.mxu0 0.0
        %917 = vmatprep.subr.mxu0 0.0
        %918 = vmatpush1.msra.mxu0 0.0
        %919 = vmatprep.subr.mxu0 0.0
        %920 = vmatpush1.msra.mxu0 0.0
        %921 = vmatprep.subr.mxu0 0.0
        %922 = vmatpush1.msra.mxu0 0.0
        %923 = vmatprep.subr.mxu0 0.0
        %924 = vmatpush1.msra.mxu0 0.0
        %925 = vmatprep.subr.mxu0 0.0
        %926 = vmatpush1.msra.mxu0 0.0
        %927 = vmatprep.subr.mxu0 0.0
        %928 = vmatpush1.msra.mxu0 0.0
        %929 = vmatprep.subr.mxu0 0.0
        %930 = vmatpush1.msra.mxu0 0.0
        %931 = vmatprep.subr.mxu0 0.0
        %932 = vmatpush1.msra.mxu0 0.0
        %933 = vmatprep.subr.mxu0 0.0
        %934 = vmatpush1.msra.mxu0 0.0
        %935 = vmatprep.subr.mxu0 0.0
        %936 = vmatpush1.msra.mxu0 0.0
        %937 = vmatprep.subr.mxu0 0.0
        %938 = vmatpush1.msra.mxu0 0.0
        %939 = vmatprep.subr.mxu0 0.0
        %940 = vmatpush1.msra.mxu0 0.0
        %941 = vmatprep.subr.mxu0 0.0
        %942 = vmatpush1.msra.mxu0 0.0
        %943 = vmatprep.subr.mxu0 0.0
        %944 = vmatpush1.msra.mxu0 0.0
        %945 = vmatprep.subr.mxu0 0.0
        %946 = vmatpush1.msra.mxu0 0.0
        %947 = vmatprep.mubr.f32.mxu0 0.0
        %948 = vmatmul.mubr.f32.gmra.mrb[0].mxu0 %v872
        %v949 = vpop.f32.mrb[0].mxu0
        %v950 = vadd.f32 %v864, %v949
        %v951 = vpop.f32.mrb[0].mxu0
        %v952 = vadd.f32 %v864, %v951
        %953 = vmatprep.mubr.f32.mxu0 0.0
        %954 = vmatmul.mubr.f32.gmra.mrb[0].mxu0 %v875
        %v955 = vpop.f32.mrb[0].mxu0
        %v956 = vadd.f32 %v869, %v955
        %v957 = vpop.f32.mrb[0].mxu0
        %v958 = vadd.f32 %v869, %v957
        %959 = vdwg.mxu0
        %960 = vst [vmem:[%s393] sm:$0xff] %v950
        %961 = vst [vmem:[%s393 + $0x8] sm:$0xff] %v952
        %962 = vst [vmem:[%s393 + $0x10] sm:$0xff] %v956
        %963 = vst [vmem:[%s393 + $0x18] sm:$0xff] %v958
        %s964 = sand.u32 %s252, 1
        %s965 = scalar_lea.sflag [#allocation3], %s964
        %s966 = sand.u32 %s252, 1
        %s967 = smul.addr %s966, 32
        %s968 = scalar_lea.vmem [#allocation2], %s967
        // Predicated region
        $region61: #{tpu_custom_call.1} parent=59 // pred_check
          %p969 = pneg %p262
        $region62: #{tpu_custom_call.1} parent=59 // pred_check_branch
          %971 = sbr.rel (%p969) target = $region64
        $region63: #{tpu_custom_call.1} parent=59 // pred_region
          %s972 = smul.u32 2, %s24
          %s973 = ssub.s32 3, %s972
          %p974 = scmp.lt.s32.totalorder %s973, 2
          %s975 = scalar_select %p974, %s973, 2
          %s976 = smul.u32 256, %s975
          %s978 = ssub.s32 512, %s976
          %979 = vsyncadd %s965, %s978
          %p980 = scmp.ne.s32.totalorder 0, %s976
          %s981 = smul.addr %s972, 128
          %s982 = scalar_lea.hbm %s10, %s981
          %s983 = smul.u32 %s975, 8
          %s984 = smul.u32 %s983, 2
          %s985 = sshll.u32 %s968, 4
          %s986 = int_to_ptr.vmem [resolvable:$true] %s985
          %s987 = sshll.u32 %s984, 4
          %991 = dma.vmem_to_hbm [thread:$0]  (%p980), %s986, %s987, %s982, %s965, 256, 384, %s983
        $region64: #{tpu_custom_call.1} parent=59 // pred_fallthru
          _
      $region60: #{tpu_custom_call.1} parent=5 // pred_fallthru
        _
      %p992 = scmp.le.s32.totalorder 2, %s19
      // Predicated region
      $region65: #{tpu_custom_call.1} parent=5 // pred_check
        %p993 = pneg %p992
      $region66: #{tpu_custom_call.1} parent=5 // pred_check_branch
        %995 = sbr.rel (%p993) target = $region68
      $region67: #{tpu_custom_call.1} parent=5 // pred_region
        %s996 = ssub.s32 %s19, 2
        // Predicated region
        $region69: #{tpu_custom_call.1} parent=67 // pred_check
          %p997 = pneg %p268
        $region70: #{tpu_custom_call.1} parent=67 // pred_check_branch
          %999 = sbr.rel (%p997) target = $region72
        $region71: #{tpu_custom_call.1} parent=67 // pred_region
          %s1000 = sand.u32 %s253, 1
          %s1001 = scalar_lea.sflag [#allocation3], %s1000
          %s1002 = sand.u32 %s253, 1
          %s1003 = smul.addr %s1002, 32
          %s1004 = scalar_lea.vmem [#allocation2], %s1003
          %1005 = dma.done %s1001, 512
        $region72: #{tpu_custom_call.1} parent=67 // pred_fallthru
          _
      $region68: #{tpu_custom_call.1} parent=5 // pred_fallthru
        _
    $region6: #{tpu_custom_call.1} parent=1 // loop_footer
      %s23 = sadd.s32 1, %s19
    $region7: #{tpu_custom_call.1} parent=1 // loop_footer_branch
      %18 = sbr.rel target = $region3
    $region8: #{tpu_custom_call.1} parent=1 // loop_exit
      _
    %1006 = vsyncpa [#allocation3], 1
    %s1007 = scalar_lea.sflag [#allocation3], 1
    %1008 = vsyncpa %s1007, 1

</llo_original>
